<compile_context>
chip_gen: v6e
topology: v6e:2x2x1
jax: 0.10.0
libtpu: 0.0.40
codegen_flags: <defaults>
</compile_context>

<pallas_src>
import jax
import jax.numpy as jnp
from jax.experimental import pallas as pl
from jax.experimental.pallas import tpu as pltpu


# ------------------------------------------------------------------ Pallas kernel
def _fused_kernel(emb_ref, mask_ref, tokmat_ref, arg_ref,
                  wenc_ref, benc_ref, wh_ref, wf_ref, bfnn_ref,
                  out_ref, bert_scr):
    # Block shapes (Bb = batch elements per grid step):
    #   emb_ref    (Bb*S, Hin) bf16      mask_ref (Bb*S, 1) f32
    #   tokmat_ref (Bb, S, T)  f32       arg_ref  (Bb, N, T, F) f32
    #   wenc_ref   (Hin, H) bf16         benc_ref (1, H) f32
    #   wh_ref     (H, Lp) bf16          wf_ref   (F, Lp) f32     bfnn_ref (1, Lp) f32
    #   out_ref    (Bb, N, T, Lp) f32    bert_scr VMEM (Bb*S, H) f32
    Bb, S, T = tokmat_ref.shape
    _, N, _, F = arg_ref.shape
    H = bert_scr.shape[1]
    Lp = out_ref.shape[3]
    CH = 16 if S % 16 == 0 else 8            # streaming-max chunk (multiple of 8 sublanes)
    n_chunks = S // CH
    NEG = jnp.float32(-1e30)

    # --- BERT stub: single dense + tanh
    # TODO(synk): full pretrained BERT transformer stack is an external ctor arg (`model`);
    #             it is stubbed here as embedding-lookup (glue) + one dense layer.
    # bf16 inputs on the MXU, f32 accumulate; tanh / mask / pooling kept in f32.
    bert = jnp.dot(emb_ref[...], wenc_ref[...], preferred_element_type=jnp.float32)
    bert = jnp.tanh(bert + benc_ref[...])                         # (Bb*S, H) f32
    # --- bert_output[0] * input_mask (mask broadcast over hidden), stash in VMEM scratch
    bert_scr[...] = bert * mask_ref[...]

    wf = wf_ref[...]                                              # (F, Lp) f32
    bias = bfnn_ref[...]                                          # (1, Lp) f32
    wh = wh_ref[...]                                              # (H, Lp) bf16

    for b in range(Bb):                                           # static unroll over batch block
        # --- get_token_input: per-token max over its subword span, streamed over S
        # (running (T, H) accumulator; no materialized (T, S, H) temp)
        def body(c, acc, b=b):
            off_t = pl.multiple_of(c * CH, CH)
            off_b = pl.multiple_of(b * S + c * CH, CH)
            bert_c = bert_scr[pl.ds(off_b, CH), :]                # (CH, H) f32 (already masked)
            tm_c = tokmat_ref[b, pl.ds(off_t, CH), :]             # (CH, T) f32 membership
            cand = jnp.where(tm_c[:, :, None] > 0.0,
                             bert_c[:, None, :], NEG)             # (CH, T, H)
            return jnp.maximum(acc, jnp.max(cand, axis=0))        # (T, H) running max

        tok = jax.lax.fori_loop(0, n_chunks, body,
                                jnp.full((T, H), NEG, jnp.float32),
                                unroll=True)
        # tokens covered by no subword keep the sentinel -> zero rows
        # (pure VPU compare/select, no cross-lane reduction needed)
        tok = jnp.where(tok > jnp.float32(-1e20), tok, 0.0)       # (T, H) f32

        # --- FNN(cat(token_repr broadcast over N, arg_seq))  (dropout = identity in eval mode)
        # token part: lane-dense MXU matmul (L padded to Lp=128 in the wrapper)
        tok_part = jnp.dot(tok.astype(jnp.bfloat16), wh,
                           preferred_element_type=jnp.float32)    # (T, Lp)
        acc_o = tok_part[None, :, :] + bias[None, :, :]           # (1, T, Lp)
        # arg part: K=5 contraction unrolled on the VPU (MXU would be <1% utilized)
        arg_b = arg_ref[b]                                        # (N, T, F) f32
        for f in range(F):
            acc_o = acc_o + arg_b[:, :, f:f + 1] * wf[f:f + 1, :][None, :, :]
        out_ref[b] = jnp.broadcast_to(acc_o, (N, T, Lp))          # lane-dense (N, T, Lp) store


def fused_logits(emb, input_mask, token_map_mat, arg_seq,
                 W_enc, b_enc, W_h, W_f, b_fnn, *, block_b=1):
    """emb (B,S,Hin), input_mask (B,S), token_map_mat (B,T,S), arg_seq (B,N,T,F)."""
    B, S, Hin = emb.shape
    H = W_enc.shape[1]
    _, T, _ = token_map_mat.shape
    _, N, _, F = arg_seq.shape
    L = W_h.shape[1]
    Lp = ((L + 127) // 128) * 128            # pad FNN output to a lane-dense multiple of 128

    assert B % block_b == 0 and S % 8 == 0
    Bb = block_b

    # ---- layout / dtype plumbing (XLA side, outside the kernel) ----
    emb2 = emb.reshape(B * S, Hin).astype(jnp.bfloat16)           # bf16 MXU input, half the DMA
    mask2 = input_mask.reshape(B * S, 1).astype(jnp.float32)
    tokmat_st = jnp.swapaxes(token_map_mat, 1, 2).astype(jnp.float32)   # (B, S, T): S on sublanes
    arg_f = arg_seq.astype(jnp.float32)

    W_enc_b = W_enc.astype(jnp.bfloat16)
    b_enc_f = b_enc.astype(jnp.float32).reshape(1, H)
    W_h_p = jnp.zeros((H, Lp), jnp.bfloat16).at[:, :L].set(W_h.astype(jnp.bfloat16))
    W_f_p = jnp.zeros((F, Lp), jnp.float32).at[:, :L].set(W_f.astype(jnp.float32))
    b_fnn_p = jnp.zeros((1, Lp), jnp.float32).at[:, :L].set(
        b_fnn.reshape(1, L).astype(jnp.float32))

    out_p = pl.pallas_call(
        _fused_kernel,
        out_shape=jax.ShapeDtypeStruct((B, N, T, Lp), jnp.float32),
        grid_spec=pltpu.PrefetchScalarGridSpec(
            num_scalar_prefetch=0,
            grid=(B // Bb,),
            in_specs=[
                pl.BlockSpec((Bb * S, Hin), lambda b: (b, 0)),
                pl.BlockSpec((Bb * S, 1), lambda b: (b, 0)),
                pl.BlockSpec((Bb, S, T), lambda b: (b, 0, 0)),
                pl.BlockSpec((Bb, N, T, F), lambda b: (b, 0, 0, 0)),
                pl.BlockSpec((Hin, H), lambda b: (0, 0)),
                pl.BlockSpec((1, H), lambda b: (0, 0)),
                pl.BlockSpec((H, Lp), lambda b: (0, 0)),
                pl.BlockSpec((F, Lp), lambda b: (0, 0)),
                pl.BlockSpec((1, Lp), lambda b: (0, 0)),
            ],
            out_specs=pl.BlockSpec((Bb, N, T, Lp), lambda b: (b, 0, 0, 0)),
            scratch_shapes=[pltpu.VMEM((Bb * S, H), jnp.float32)],
        ),
        compiler_params=pltpu.CompilerParams(
            # batch axis is fully independent -> shardable across v7x's 2 TensorCores
            dimension_semantics=("parallel",),
            # explicit VMEM budget (leaves headroom on v7x's 64 MiB physical VMEM)
            vmem_limit_bytes=48 * 1024 * 1024),
    )(emb2, mask2, tokmat_st, arg_f, W_enc_b, b_enc_f, W_h_p, W_f_p, b_fnn_p)

    return out_p[..., :L]                    # strip lane padding


# ------------------------------------------------------------------ pure-JAX reference (correctness)
def reference_logits(emb, input_mask, token_map_mat, arg_seq,
                     W_enc, b_enc, W_h, W_f, b_fnn):
    bert = jnp.dot(emb.astype(jnp.bfloat16), W_enc.astype(jnp.bfloat16),
                   preferred_element_type=jnp.float32)
    bert = jnp.tanh(bert + b_enc.astype(jnp.float32).reshape(1, 1, -1))
    bert = bert * input_mask[..., None]                            # (B, S, H) masked
    memb = token_map_mat > 0                                       # (B, T, S)
    cand = jnp.where(memb[..., None], bert[:, None, :, :], -1e30)  # (B, T, S, H)
    tok = jnp.max(cand, axis=2)
    tok = jnp.where(tok > -1e20, tok, 0.0)                         # (B, T, H)
    tok_part = jnp.dot(tok.astype(jnp.bfloat16), W_h.astype(jnp.bfloat16),
                       preferred_element_type=jnp.float32)         # (B, T, L)
    arg_part = jnp.einsum('bntf,fl->bntl', arg_seq.astype(jnp.float32),
                          W_f.astype(jnp.float32))                 # (B, N, T, L)
    return tok_part[:, None, :, :] + arg_part + b_fnn.reshape(1, 1, 1, -1).astype(jnp.float32)


# ------------------------------------------------------------------ CRF Viterbi (glue, plain JAX)
def crf_viterbi_decode(emissions, mask, start_trans, end_trans, trans):
    """emissions (M, T, L), mask (M, T) bool -> best tags (M, T), invalid positions = -1."""
    M, T, L = emissions.shape
    score0 = start_trans[None, :] + emissions[:, 0]               # (M, L)

    em_rest = jnp.moveaxis(emissions[:, 1:], 1, 0)                # (T-1, M, L)
    mk_rest = jnp.moveaxis(mask[:, 1:], 1, 0)                     # (T-1, M)

    def fwd(score, xs):
        em_t, m_t = xs
        nxt = score[:, :, None] + trans[None, :, :] + em_t[:, None, :]   # (M, L, L)
        idx = jnp.argmax(nxt, axis=1)                             # (M, L)
        best = jnp.max(nxt, axis=1)                               # (M, L)
        new_score = jnp.where(m_t[:, None], best, score)
        return new_score, idx

    score, history = jax.lax.scan(fwd, score0, (em_rest, mk_rest))
    score = score + end_trans[None, :]
    last = jnp.argmax(score, axis=-1)                             # (M,) tag at last valid position

    def bwd(cur, xs):
        idx_t, m_t = xs
        prev = jnp.take_along_axis(idx_t, cur[:, None], axis=1)[:, 0]
        new_cur = jnp.where(m_t, prev, cur)
        return new_cur, new_cur                                   # tag at position t-1

    _, ys = jax.lax.scan(bwd, last, (history, mk_rest), reverse=True)    # (T-1, M)
    tags = jnp.concatenate([ys.T, last[:, None]], axis=1)         # (M, T)
    return jnp.where(mask, tags, -1)


# ------------------------------------------------------------------ full forward (rel_tags=None path)
@jax.jit
def bert_noCLS_forward(params, input_id, input_mask, token_map_mat, arg_seq, crf_mask):
    emb = params["emb_table"][input_id]                           # (B, S, H_in) embedding lookup (glue)
    logits = fused_logits(emb, input_mask.astype(jnp.float32),
                          token_map_mat.astype(jnp.float32),
                          arg_seq.astype(jnp.float32),
                          params["W_enc"], params["b_enc"],
                          params["W_h"], params["W_f"], params["b_fnn"],
                          block_b=1)
    B, N, T, L = logits.shape
    decoded = crf_viterbi_decode(logits.reshape(B * N, T, L),
                                 crf_mask.reshape(B * N, T),
                                 params["crf_start"], params["crf_end"],
                                 params["crf_trans"]).reshape(B, N, T)
    return decoded, logits


if __name__ == "__main__":
    B, S, H, T, N, F, L, V = 2, 16, 32, 8, 4, 5, 6, 50   # F=5 (pos_result=False), L=rel_label

    key = jax.random.PRNGKey(0)
    ks = jax.random.split(key, 12)
    params = {
        "emb_table": 0.1 * jax.random.normal(ks[0], (V, H), jnp.float32),
        "W_enc":     0.1 * jax.random.normal(ks[1], (H, H), jnp.float32),
        "b_enc":     0.1 * jax.random.normal(ks[2], (1, H), jnp.float32),
        "W_h":       0.1 * jax.random.normal(ks[3], (H, L), jnp.float32),   # FNN weight rows [:H]
        "W_f":       0.1 * jax.random.normal(ks[4], (F, L), jnp.float32),   # FNN weight rows [H:H+5]
        "b_fnn":     0.1 * jax.random.normal(ks[5], (1, L), jnp.float32),
        "crf_start": 0.1 * jax.random.normal(ks[6], (L,), jnp.float32),
        "crf_end":   0.1 * jax.random.normal(ks[7], (L,), jnp.float32),
        "crf_trans": 0.1 * jax.random.normal(ks[8], (L, L), jnp.float32),
    }

    input_id = jax.random.randint(ks[9], (B, S), 0, V, jnp.int32)
    input_mask = jnp.ones((B, S), jnp.float32).at[:, S - 2:].set(0.0)       # last 2 subwords padded

    # token_map: token j spans subwords {2j, 2j+1}  ->  membership matrix (B, T, S)
    tok_idx = jnp.arange(T)[:, None]
    sub_idx = jnp.arange(S)[None, :]
    tokmat1 = ((sub_idx // 2) == tok_idx).astype(jnp.float32)               # (T, S)
    token_map_mat = jnp.broadcast_to(tokmat1, (B, T, S))

    arg_seq = jax.random.normal(ks[10], (B, N, T, F), jnp.float32)

    # crf_mask (B, N, T): contiguous-from-zero valid regions (mask[..., 0] must be True)
    valid_len = jnp.array([[T, T - 1, T - 2, T - 3],
                           [T, T, T - 4, T - 1]], jnp.int32)                # (B, N)
    crf_mask = (jnp.arange(T)[None, None, :] < valid_len[:, :, None])
    seq_len = jnp.array([4, 3], jnp.int32)                                  # how many arg-sequences kept

    decoded, logits = jax.block_until_ready(
        bert_noCLS_forward(params, input_id, input_mask, token_map_mat, arg_seq, crf_mask))

    # correctness: fused Pallas emissions vs pure-JAX reference (same bf16 math)
    emb_chk = params["emb_table"][input_id]
    ref = jax.block_until_ready(
        reference_logits(emb_chk, input_mask, token_map_mat, arg_seq,
                         params["W_enc"], params["b_enc"],
                         params["W_h"], params["W_f"], params["b_fnn"]))
    assert jnp.allclose(logits, ref, atol=5e-3, rtol=5e-3), \
        f"max |diff| = {float(jnp.max(jnp.abs(logits - ref)))}"

    # result[i] = decode(logits[i])[0:seq_len[i]]  (list slicing done at Python level, like the module)
    result = [decoded[i, :int(seq_len[i])] for i in range(B)]
    logit_result = [logits[i] for i in range(B)]

    assert logits.shape == (B, N, T, L) and decoded.shape == (B, N, T)
    assert len(result) == B and result[0].shape == (int(seq_len[0]), T)
    print("KERNEL_OK")
</pallas_src>

<mosaic_0001>
module attributes {stable_mosaic.version = 11 : i64} {
  func.func @_fused_kernel(%arg0: i32, %arg1: memref<16x32xbf16, #tpu.memory_space<vmem>>, %arg2: memref<16x1xf32, #tpu.memory_space<vmem>>, %arg3: memref<1x16x8xf32, #tpu.memory_space<vmem>>, %arg4: memref<1x4x8x5xf32, #tpu.memory_space<vmem>>, %arg5: memref<32x32xbf16, #tpu.memory_space<vmem>>, %arg6: memref<1x32xf32, #tpu.memory_space<vmem>>, %arg7: memref<32x128xbf16, #tpu.memory_space<vmem>>, %arg8: memref<5x128xf32, #tpu.memory_space<vmem>>, %arg9: memref<1x128xf32, #tpu.memory_space<vmem>>, %arg10: memref<1x4x8x128xf32, #tpu.memory_space<vmem>>, %arg11: memref<16x32xf32, #tpu.memory_space<vmem>>) attributes {dimension_semantics = [#tpu.dimension_semantics<parallel>], iteration_bounds = array<i64: 2>, scalar_prefetch = 0 : i64, scratch_operands = 1 : i64, tpu.core_type = #tpu.core_type<tc>, window_params = [{transform_indices = @transform_0, window_bounds = array<i64: 16, 32>}, {transform_indices = @transform_1, window_bounds = array<i64: 16, 1>}, {transform_indices = @transform_2, window_bounds = array<i64: 1, 16, 8>}, {transform_indices = @transform_3, window_bounds = array<i64: 1, 4, 8, 5>}, {pipeline_mode = #tpu.pipeline_mode<synchronous>, transform_indices = @transform_4, window_bounds = array<i64: 32, 32>}, {pipeline_mode = #tpu.pipeline_mode<synchronous>, transform_indices = @transform_5, window_bounds = array<i64: 1, 32>}, {pipeline_mode = #tpu.pipeline_mode<synchronous>, transform_indices = @transform_6, window_bounds = array<i64: 32, 128>}, {pipeline_mode = #tpu.pipeline_mode<synchronous>, transform_indices = @transform_7, window_bounds = array<i64: 5, 128>}, {pipeline_mode = #tpu.pipeline_mode<synchronous>, transform_indices = @transform_8, window_bounds = array<i64: 1, 128>}, {transform_indices = @transform_9, window_bounds = array<i64: 1, 4, 8, 128>}]} {
    %c0 = arith.constant 0 : index
    %c0_0 = arith.constant 0 : index
    %0 = vector.load %arg1[%c0, %c0_0] : memref<16x32xbf16, #tpu.memory_space<vmem>>, vector<16x32xbf16>
    %c0_1 = arith.constant 0 : index
    %c0_2 = arith.constant 0 : index
    %1 = vector.load %arg5[%c0_1, %c0_2] : memref<32x32xbf16, #tpu.memory_space<vmem>>, vector<32x32xbf16>
    %cst = arith.constant dense<0.000000e+00> : vector<16x32xf32>
    %2 = tpu.matmul %0, %1, %cst {dimension_numbers = #tpu.dot_dimension_numbers<[1], [0], [0], [1], [0, 0, 1, 1], [], []>} : vector<16x32xbf16>, vector<32x32xbf16>, vector<16x32xf32> -> vector<16x32xf32>
    %c0_3 = arith.constant 0 : index
    %c0_4 = arith.constant 0 : index
    %3 = vector.load %arg6[%c0_3, %c0_4] : memref<1x32xf32, #tpu.memory_space<vmem>>, vector<1x32xf32>
    %4 = vector.broadcast %3 : vector<1x32xf32> to vector<16x32xf32>
    %5 = arith.addf %2, %4 : vector<16x32xf32>
    %6 = math.tanh %5 : vector<16x32xf32>
    %c0_5 = arith.constant 0 : index
    %c0_6 = arith.constant 0 : index
    %7 = vector.load %arg2[%c0_5, %c0_6] : memref<16x1xf32, #tpu.memory_space<vmem>>, vector<16x1xf32>
    %8 = vector.broadcast %7 : vector<16x1xf32> to vector<16x32xf32>
    %9 = arith.mulf %6, %8 : vector<16x32xf32>
    %c0_7 = arith.constant 0 : index
    %c0_8 = arith.constant 0 : index
    %10 = vector.load %arg11[%c0_7, %c0_8] : memref<16x32xf32, #tpu.memory_space<vmem>>, vector<16x32xf32>
    tpu.vector_store %arg11[%c0_7, %c0_8], %9 {strides = array<i32>} : memref<16x32xf32, #tpu.memory_space<vmem>>, vector<16x32xf32>,
    %c0_9 = arith.constant 0 : index
    %c0_10 = arith.constant 0 : index
    %11 = vector.load %arg8[%c0_9, %c0_10] : memref<5x128xf32, #tpu.memory_space<vmem>>, vector<5x128xf32>
    %c0_11 = arith.constant 0 : index
    %c0_12 = arith.constant 0 : index
    %12 = vector.load %arg9[%c0_11, %c0_12] : memref<1x128xf32, #tpu.memory_space<vmem>>, vector<1x128xf32>
    %c0_13 = arith.constant 0 : index
    %c0_14 = arith.constant 0 : index
    %13 = vector.load %arg7[%c0_13, %c0_14] : memref<32x128xbf16, #tpu.memory_space<vmem>>, vector<32x128xbf16>
    %cst_15 = arith.constant -1.000000e+30 : f32
    %14 = vector.broadcast %cst_15 : f32 to vector<8x32xf32>
    %cst_16 = arith.constant -1.000000e+30 : f32
    %c0_i32 = arith.constant 0 : i32
    %c16_i32 = arith.constant 16 : i32
    %15 = arith.muli %c0_i32, %c16_i32 : i32
    %16 = tpu.assume_multiple %15, 16 : i32
    %c16_i32_17 = arith.constant 16 : i32
    %17 = arith.muli %c0_i32, %c16_i32_17 : i32
    %c0_i32_18 = arith.constant 0 : i32
    %18 = arith.addi %c0_i32_18, %17 : i32
    %19 = tpu.assume_multiple %18, 16 : i32
    %20 = arith.index_cast %19 : i32 to index
    %c0_19 = arith.constant 0 : index
    %21 = vector.load %arg11[%20, %c0_19] : memref<16x32xf32, #tpu.memory_space<vmem>>, vector<16x32xf32>
    %c0_20 = arith.constant 0 : index
    %22 = arith.index_cast %16 : i32 to index
    %c0_21 = arith.constant 0 : index
    %23 = vector.load %arg3[%c0_20, %22, %c0_21] : memref<1x16x8xf32, #tpu.memory_space<vmem>>, vector<1x16x8xf32>
    %24 = vector.shape_cast %23 : vector<1x16x8xf32> to vector<16x8xf32>
    %25 = vector.shape_cast %24 : vector<16x8xf32> to vector<16x8x1xf32>
    %cst_22 = arith.constant 0.000000e+00 : f32
    %26 = vector.broadcast %cst_22 : f32 to vector<16x8x1xf32>
    %27 = arith.cmpf ogt, %25, %26 : vector<16x8x1xf32>
    %28 = vector.shape_cast %21 : vector<16x32xf32> to vector<16x1x32xf32>
    %29 = vector.shape_cast %27 : vector<16x8x1xi1> to vector<16x8x1xi1>
    %30 = vector.broadcast %29 : vector<16x8x1xi1> to vector<16x8x32xi1>
    %31 = vector.shape_cast %28 : vector<16x1x32xf32> to vector<16x1x32xf32>
    %32 = vector.broadcast %31 : vector<16x1x32xf32> to vector<16x8x32xf32>
    %33 = vector.broadcast %cst_16 : f32 to vector<16x8x32xf32>
    %34 = arith.select %30, %32, %33 : vector<16x8x32xi1>, vector<16x8x32xf32>
    %cst_23 = arith.constant dense<0xFF800000> : vector<8x32xf32>
    %35 = vector.multi_reduction <maximumf>, %34, %cst_23 [0] : vector<16x8x32xf32> to vector<8x32xf32>
    %36 = arith.maximumf %14, %35 : vector<8x32xf32>
    %c1_i32 = arith.constant 1 : i32
    %cst_24 = arith.constant -1.000000e+20 : f32
    %37 = vector.broadcast %cst_24 : f32 to vector<8x32xf32>
    %38 = arith.cmpf ogt, %36, %37 : vector<8x32xf32>
    %cst_25 = arith.constant 0.000000e+00 : f32
    %39 = vector.broadcast %cst_25 : f32 to vector<8x32xf32>
    %40 = arith.select %38, %36, %39 : vector<8x32xi1>, vector<8x32xf32>
    %41 = arith.truncf %40 : vector<8x32xf32> to vector<8x32xbf16>
    %cst_26 = arith.constant dense<0.000000e+00> : vector<8x128xf32>
    %42 = tpu.matmul %41, %13, %cst_26 {dimension_numbers = #tpu.dot_dimension_numbers<[1], [0], [0], [1], [0, 0, 1, 1], [], []>} : vector<8x32xbf16>, vector<32x128xbf16>, vector<8x128xf32> -> vector<8x128xf32>
    %43 = vector.shape_cast %42 : vector<8x128xf32> to vector<1x8x128xf32>
    %44 = vector.shape_cast %12 : vector<1x128xf32> to vector<1x1x128xf32>
    %45 = vector.broadcast %44 : vector<1x1x128xf32> to vector<1x8x128xf32>
    %46 = arith.addf %43, %45 : vector<1x8x128xf32>
    %c0_27 = arith.constant 0 : index
    %c0_28 = arith.constant 0 : index
    %c0_29 = arith.constant 0 : index
    %c0_30 = arith.constant 0 : index
    %47 = vector.load %arg4[%c0_27, %c0_28, %c0_29, %c0_30] : memref<1x4x8x5xf32, #tpu.memory_space<vmem>>, vector<1x4x8x5xf32>
    %48 = vector.shape_cast %47 : vector<1x4x8x5xf32> to vector<4x8x5xf32>
    %49 = vector.extract_strided_slice %48 {offsets = [0, 0, 0], sizes = [4, 8, 1], strides = [1, 1, 1]} : vector<4x8x5xf32> to vector<4x8x1xf32>
    %50 = vector.extract_strided_slice %11 {offsets = [0, 0], sizes = [1, 128], strides = [1, 1]} : vector<5x128xf32> to vector<1x128xf32>
    %51 = vector.shape_cast %50 : vector<1x128xf32> to vector<1x1x128xf32>
    %52 = vector.broadcast %49 : vector<4x8x1xf32> to vector<4x8x128xf32>
    %53 = vector.broadcast %51 : vector<1x1x128xf32> to vector<4x8x128xf32>
    %54 = arith.mulf %52, %53 : vector<4x8x128xf32>
    %55 = vector.broadcast %46 : vector<1x8x128xf32> to vector<4x8x128xf32>
    %56 = arith.addf %55, %54 : vector<4x8x128xf32>
    %57 = vector.extract_strided_slice %48 {offsets = [0, 0, 1], sizes = [4, 8, 1], strides = [1, 1, 1]} : vector<4x8x5xf32> to vector<4x8x1xf32>
    %58 = vector.extract_strided_slice %11 {offsets = [1, 0], sizes = [1, 128], strides = [1, 1]} : vector<5x128xf32> to vector<1x128xf32>
    %59 = vector.shape_cast %58 : vector<1x128xf32> to vector<1x1x128xf32>
    %60 = vector.broadcast %57 : vector<4x8x1xf32> to vector<4x8x128xf32>
    %61 = vector.broadcast %59 : vector<1x1x128xf32> to vector<4x8x128xf32>
    %62 = arith.mulf %60, %61 : vector<4x8x128xf32>
    %63 = arith.addf %56, %62 : vector<4x8x128xf32>
    %64 = vector.extract_strided_slice %48 {offsets = [0, 0, 2], sizes = [4, 8, 1], strides = [1, 1, 1]} : vector<4x8x5xf32> to vector<4x8x1xf32>
    %65 = vector.extract_strided_slice %11 {offsets = [2, 0], sizes = [1, 128], strides = [1, 1]} : vector<5x128xf32> to vector<1x128xf32>
    %66 = vector.shape_cast %65 : vector<1x128xf32> to vector<1x1x128xf32>
    %67 = vector.broadcast %64 : vector<4x8x1xf32> to vector<4x8x128xf32>
    %68 = vector.broadcast %66 : vector<1x1x128xf32> to vector<4x8x128xf32>
    %69 = arith.mulf %67, %68 : vector<4x8x128xf32>
    %70 = arith.addf %63, %69 : vector<4x8x128xf32>
    %71 = vector.extract_strided_slice %48 {offsets = [0, 0, 3], sizes = [4, 8, 1], strides = [1, 1, 1]} : vector<4x8x5xf32> to vector<4x8x1xf32>
    %72 = vector.extract_strided_slice %11 {offsets = [3, 0], sizes = [1, 128], strides = [1, 1]} : vector<5x128xf32> to vector<1x128xf32>
    %73 = vector.shape_cast %72 : vector<1x128xf32> to vector<1x1x128xf32>
    %74 = vector.broadcast %71 : vector<4x8x1xf32> to vector<4x8x128xf32>
    %75 = vector.broadcast %73 : vector<1x1x128xf32> to vector<4x8x128xf32>
    %76 = arith.mulf %74, %75 : vector<4x8x128xf32>
    %77 = arith.addf %70, %76 : vector<4x8x128xf32>
    %78 = vector.extract_strided_slice %48 {offsets = [0, 0, 4], sizes = [4, 8, 1], strides = [1, 1, 1]} : vector<4x8x5xf32> to vector<4x8x1xf32>
    %79 = vector.extract_strided_slice %11 {offsets = [4, 0], sizes = [1, 128], strides = [1, 1]} : vector<5x128xf32> to vector<1x128xf32>
    %80 = vector.shape_cast %79 : vector<1x128xf32> to vector<1x1x128xf32>
    %81 = vector.broadcast %78 : vector<4x8x1xf32> to vector<4x8x128xf32>
    %82 = vector.broadcast %80 : vector<1x1x128xf32> to vector<4x8x128xf32>
    %83 = arith.mulf %81, %82 : vector<4x8x128xf32>
    %84 = arith.addf %77, %83 : vector<4x8x128xf32>
    %c0_31 = arith.constant 0 : index
    %c0_32 = arith.constant 0 : index
    %c0_33 = arith.constant 0 : index
    %c0_34 = arith.constant 0 : index
    %85 = vector.load %arg10[%c0_31, %c0_32, %c0_33, %c0_34] : memref<1x4x8x128xf32, #tpu.memory_space<vmem>>, vector<1x4x8x128xf32>
    %86 = vector.shape_cast %85 : vector<1x4x8x128xf32> to vector<4x8x128xf32>
    %87 = vector.shape_cast %84 : vector<4x8x128xf32> to vector<1x4x8x128xf32>
    tpu.vector_store %arg10[%c0_31, %c0_32, %c0_33, %c0_34], %87 {strides = array<i32>} : memref<1x4x8x128xf32, #tpu.memory_space<vmem>>, vector<1x4x8x128xf32>,
    return
  }
  func.func @transform_0(%arg0: i32) -> (i32, i32) {
    %c0_i32 = arith.constant 0 : i32
    %c0_i32_0 = arith.constant 0 : i32
    return %arg0, %c0_i32 : i32, i32
  }
  func.func @transform_1(%arg0: i32) -> (i32, i32) {
    %c0_i32 = arith.constant 0 : i32
    %c0_i32_0 = arith.constant 0 : i32
    return %arg0, %c0_i32 : i32, i32
  }
  func.func @transform_2(%arg0: i32) -> (i32, i32, i32) {
    %c0_i32 = arith.constant 0 : i32
    %c0_i32_0 = arith.constant 0 : i32
    %c0_i32_1 = arith.constant 0 : i32
    return %arg0, %c0_i32, %c0_i32_0 : i32, i32, i32
  }
  func.func @transform_3(%arg0: i32) -> (i32, i32, i32, i32) {
    %c0_i32 = arith.constant 0 : i32
    %c0_i32_0 = arith.constant 0 : i32
    %c0_i32_1 = arith.constant 0 : i32
    %c0_i32_2 = arith.constant 0 : i32
    return %arg0, %c0_i32, %c0_i32_0, %c0_i32_1 : i32, i32, i32, i32
  }
  func.func @transform_4(%arg0: i32) -> (i32, i32) {
    %c0_i32 = arith.constant 0 : i32
    %c0_i32_0 = arith.constant 0 : i32
    %c0_i32_1 = arith.constant 0 : i32
    return %c0_i32, %c0_i32_0 : i32, i32
  }
  func.func @transform_5(%arg0: i32) -> (i32, i32) {
    %c0_i32 = arith.constant 0 : i32
    %c0_i32_0 = arith.constant 0 : i32
    %c0_i32_1 = arith.constant 0 : i32
    return %c0_i32, %c0_i32_0 : i32, i32
  }
  func.func @transform_6(%arg0: i32) -> (i32, i32) {
    %c0_i32 = arith.constant 0 : i32
    %c0_i32_0 = arith.constant 0 : i32
    %c0_i32_1 = arith.constant 0 : i32
    return %c0_i32, %c0_i32_0 : i32, i32
  }
  func.func @transform_7(%arg0: i32) -> (i32, i32) {
    %c0_i32 = arith.constant 0 : i32
    %c0_i32_0 = arith.constant 0 : i32
    %c0_i32_1 = arith.constant 0 : i32
    return %c0_i32, %c0_i32_0 : i32, i32
  }
  func.func @transform_8(%arg0: i32) -> (i32, i32) {
    %c0_i32 = arith.constant 0 : i32
    %c0_i32_0 = arith.constant 0 : i32
    %c0_i32_1 = arith.constant 0 : i32
    return %c0_i32, %c0_i32_0 : i32, i32
  }
  func.func @transform_9(%arg0: i32) -> (i32, i32, i32, i32) {
    %c0_i32 = arith.constant 0 : i32
    %c0_i32_0 = arith.constant 0 : i32
    %c0_i32_1 = arith.constant 0 : i32
    %c0_i32_2 = arith.constant 0 : i32
    return %arg0, %c0_i32, %c0_i32_0, %c0_i32_1 : i32, i32, i32, i32
  }
}

</mosaic_0001>

<llo_original>
// kernel: custom-call.4
$region0: #{custom-call.4}
  %s0 = inlined_call_operand.vmem [shape: s32[7,8,6], index: 0, kind: output, shape index: {}]

// kernel: bert_noCLS_forward.1
$region0: #{bert_noCLS_forward.1}
  #allocation0 [shape = 'u32[]', space=smem, size = 0x4, offset = 0x4, fixed_abs, tag = 'smem constant byte address 0x4 - core index']
  #allocation1 [shape = 'u32[144,128]{1,0:T(1,128)}', space=vmem, size = 0x12000, scoped, tag = 'internal scratch']
  #allocation2 [shape = 'f32[16,32]{1,0:T(8,128)}', space=vmem, size = 0x2000, scoped, tag = 'scratch operand']
  %s0 = inlined_call_operand.vmem [shape: bf16[32,32], index: 0, kind: input, shape index: {}]
  %s1 = inlined_call_operand.vmem [shape: f32[32,1], index: 1, kind: input, shape index: {}]
  %s2 = inlined_call_operand.vmem [shape: f32[2,16,8], index: 2, kind: input, shape index: {}]
  %s3 = inlined_call_operand.vmem [shape: f32[2,4,8,5], index: 3, kind: input, shape index: {}]
  %s4 = inlined_call_operand.vmem [shape: bf16[32,32], index: 4, kind: input, shape index: {}]
  %s5 = inlined_call_operand.vmem [shape: f32[1,32], index: 5, kind: input, shape index: {}]
  %s6 = inlined_call_operand.vmem [shape: bf16[32,128], index: 6, kind: input, shape index: {}]
  %s7 = inlined_call_operand.vmem [shape: f32[5,128], index: 7, kind: input, shape index: {}]
  %s8 = inlined_call_operand.vmem [shape: f32[1,128], index: 8, kind: input, shape index: {}]
  %s9 = inlined_call_operand.vmem [shape: f32[2,4,8,128], index: 9, kind: output, shape index: {}]
  %s10 = sld [smem:[#allocation0]]
  $region69: #{bert_noCLS_forward.1} parent=0
    _
  %s12 = ssub.s32 1, %s10
  %s13 = scalar_select 0, %s12, %s10
  loop: start=0, step=1, limit=4
  $region2: #{bert_noCLS_forward.1} parent=0 // loop_pre_header
    _
  $region3: #{bert_noCLS_forward.1} parent=0 // loop_header
    %s15 = sphi 0, %s19
    %p16 = scmp.ge.s32.totalorder %s15, 4
    %s25 = sphi 0, %s27
    %s28 = sphi 0, %s25
    %s29 = sphi 0, %s28
    %s45 = sphi 0, %s29
    %s51 = sphi 0, %s53
    %s54 = sphi 0, %s51
    %s55 = sphi 0, %s54
    %s71 = sphi 0, %s55
    %s77 = sphi 0, %s79
    %s80 = sphi 0, %s77
    %s81 = sphi 0, %s80
    %s97 = sphi 0, %s81
    %s103 = sphi 0, %s105
    %s106 = sphi 0, %s103
    %s107 = sphi 0, %s106
    %s123 = sphi 0, %s107
    %s127 = sphi 0, %s127
    %s129 = sphi 0, %s127
    %s130 = sphi 0, %s129
    %s144 = sphi 0, %s130
    %s148 = sphi 0, %s148
    %s150 = sphi 0, %s148
    %s151 = sphi 0, %s150
    %s165 = sphi 0, %s151
    %s169 = sphi 0, %s169
    %s171 = sphi 0, %s169
    %s172 = sphi 0, %s171
    %s186 = sphi 0, %s172
    %s190 = sphi 0, %s190
    %s192 = sphi 0, %s190
    %s193 = sphi 0, %s192
    %s207 = sphi 0, %s193
    %s211 = sphi 0, %s211
    %s213 = sphi 0, %s211
    %s214 = sphi 0, %s213
    %s228 = sphi 0, %s214
    %s234 = sphi 0, %s236
    %s237 = sphi 0, %s234
    %s238 = sphi 0, %s237
    %s254 = sphi 0, %s238
  $region4: #{bert_noCLS_forward.1} parent=0 // loop_header_branch
    %18 = sbr.rel (%p16) target = $region8
  $region5: #{bert_noCLS_forward.1} parent=0 // loop_body
    %s20 = ssub.s32 %s15, 1
    %s21 = ssub.s32 %s15, 2
    %s22 = sadd.s32 %s15, 1
    %s23 = ssub.s32 %s15, %s22
    %p24 = scmp.eq.s32.totalorder %s23, 0
    %s26 = sadd.s32 %s25, 1
    %s27 = scalar_select %p24, %s25, %s26
    %p30 = pneg %p24
    %p31 = scmp.eq.s32.totalorder %s15, 1
    %p32 = por %p30, %p31
    %p33 = scmp.ne.s32.totalorder %s25, %s28
    %p34 = scmp.eq.s32.totalorder %s15, 0
    %p35 = por %p33, %p34
    %p36 = scmp.ne.s32.totalorder %s25, %s28
    %p37 = scmp.eq.s32.totalorder %s20, 1
    %p38 = por %p36, %p37
    %p39 = scmp.ne.s32.totalorder %s28, %s29
    %p40 = scmp.eq.s32.totalorder %s20, 0
    %p41 = por %p39, %p40
    %p42 = scmp.ne.s32.totalorder %s28, %s29
    %p43 = scmp.eq.s32.totalorder %s21, 1
    %p44 = por %p42, %p43
    %p46 = scmp.ne.s32.totalorder %s29, %s45
    %p47 = scmp.eq.s32.totalorder %s21, 0
    %p48 = por %p46, %p47
    %s49 = ssub.s32 %s15, %s22
    %p50 = scmp.eq.s32.totalorder %s49, 0
    %s52 = sadd.s32 %s51, 1
    %s53 = scalar_select %p50, %s51, %s52
    %p56 = pneg %p50
    %p57 = scmp.eq.s32.totalorder %s15, 1
    %p58 = por %p56, %p57
    %p59 = scmp.ne.s32.totalorder %s51, %s54
    %p60 = scmp.eq.s32.totalorder %s15, 0
    %p61 = por %p59, %p60
    %p62 = scmp.ne.s32.totalorder %s51, %s54
    %p63 = scmp.eq.s32.totalorder %s20, 1
    %p64 = por %p62, %p63
    %p65 = scmp.ne.s32.totalorder %s54, %s55
    %p66 = scmp.eq.s32.totalorder %s20, 0
    %p67 = por %p65, %p66
    %p68 = scmp.ne.s32.totalorder %s54, %s55
    %p69 = scmp.eq.s32.totalorder %s21, 1
    %p70 = por %p68, %p69
    %p72 = scmp.ne.s32.totalorder %s55, %s71
    %p73 = scmp.eq.s32.totalorder %s21, 0
    %p74 = por %p72, %p73
    %s75 = ssub.s32 %s15, %s22
    %p76 = scmp.eq.s32.totalorder %s75, 0
    %s78 = sadd.s32 %s77, 1
    %s79 = scalar_select %p76, %s77, %s78
    %p82 = pneg %p76
    %p83 = scmp.eq.s32.totalorder %s15, 1
    %p84 = por %p82, %p83
    %p85 = scmp.ne.s32.totalorder %s77, %s80
    %p86 = scmp.eq.s32.totalorder %s15, 0
    %p87 = por %p85, %p86
    %p88 = scmp.ne.s32.totalorder %s77, %s80
    %p89 = scmp.eq.s32.totalorder %s20, 1
    %p90 = por %p88, %p89
    %p91 = scmp.ne.s32.totalorder %s80, %s81
    %p92 = scmp.eq.s32.totalorder %s20, 0
    %p93 = por %p91, %p92
    %p94 = scmp.ne.s32.totalorder %s80, %s81
    %p95 = scmp.eq.s32.totalorder %s21, 1
    %p96 = por %p94, %p95
    %p98 = scmp.ne.s32.totalorder %s81, %s97
    %p99 = scmp.eq.s32.totalorder %s21, 0
    %p100 = por %p98, %p99
    %s101 = ssub.s32 %s15, %s22
    %p102 = scmp.eq.s32.totalorder %s101, 0
    %s104 = sadd.s32 %s103, 1
    %s105 = scalar_select %p102, %s103, %s104
    %p108 = pneg %p102
    %p109 = scmp.eq.s32.totalorder %s15, 1
    %p110 = por %p108, %p109
    %p111 = scmp.ne.s32.totalorder %s103, %s106
    %p112 = scmp.eq.s32.totalorder %s15, 0
    %p113 = por %p111, %p112
    %p114 = scmp.ne.s32.totalorder %s103, %s106
    %p115 = scmp.eq.s32.totalorder %s20, 1
    %p116 = por %p114, %p115
    %p117 = scmp.ne.s32.totalorder %s106, %s107
    %p118 = scmp.eq.s32.totalorder %s20, 0
    %p119 = por %p117, %p118
    %p120 = scmp.ne.s32.totalorder %s106, %s107
    %p121 = scmp.eq.s32.totalorder %s21, 1
    %p122 = por %p120, %p121
    %p124 = scmp.ne.s32.totalorder %s107, %s123
    %p125 = scmp.eq.s32.totalorder %s21, 0
    %p126 = por %p124, %p125
    %s128 = sadd.s32 %s127, 1
    %p131 = scmp.eq.s32.totalorder %s15, 1
    %p132 = scmp.ne.s32.totalorder %s127, %s129
    %p133 = scmp.eq.s32.totalorder %s15, 0
    %p134 = por %p132, %p133
    %p135 = scmp.ne.s32.totalorder %s127, %s129
    %p136 = scmp.eq.s32.totalorder %s20, 1
    %p137 = por %p135, %p136
    %p138 = scmp.ne.s32.totalorder %s129, %s130
    %p139 = scmp.eq.s32.totalorder %s20, 0
    %p140 = por %p138, %p139
    %p141 = scmp.ne.s32.totalorder %s129, %s130
    %p142 = scmp.eq.s32.totalorder %s21, 1
    %p143 = por %p141, %p142
    %p145 = scmp.ne.s32.totalorder %s130, %s144
    %p146 = scmp.eq.s32.totalorder %s21, 0
    %p147 = por %p145, %p146
    %s149 = sadd.s32 %s148, 1
    %p152 = scmp.eq.s32.totalorder %s15, 1
    %p153 = scmp.ne.s32.totalorder %s148, %s150
    %p154 = scmp.eq.s32.totalorder %s15, 0
    %p155 = por %p153, %p154
    %p156 = scmp.ne.s32.totalorder %s148, %s150
    %p157 = scmp.eq.s32.totalorder %s20, 1
    %p158 = por %p156, %p157
    %p159 = scmp.ne.s32.totalorder %s150, %s151
    %p160 = scmp.eq.s32.totalorder %s20, 0
    %p161 = por %p159, %p160
    %p162 = scmp.ne.s32.totalorder %s150, %s151
    %p163 = scmp.eq.s32.totalorder %s21, 1
    %p164 = por %p162, %p163
    %p166 = scmp.ne.s32.totalorder %s151, %s165
    %p167 = scmp.eq.s32.totalorder %s21, 0
    %p168 = por %p166, %p167
    %s170 = sadd.s32 %s169, 1
    %p173 = scmp.eq.s32.totalorder %s15, 1
    %p174 = scmp.ne.s32.totalorder %s169, %s171
    %p175 = scmp.eq.s32.totalorder %s15, 0
    %p176 = por %p174, %p175
    %p177 = scmp.ne.s32.totalorder %s169, %s171
    %p178 = scmp.eq.s32.totalorder %s20, 1
    %p179 = por %p177, %p178
    %p180 = scmp.ne.s32.totalorder %s171, %s172
    %p181 = scmp.eq.s32.totalorder %s20, 0
    %p182 = por %p180, %p181
    %p183 = scmp.ne.s32.totalorder %s171, %s172
    %p184 = scmp.eq.s32.totalorder %s21, 1
    %p185 = por %p183, %p184
    %p187 = scmp.ne.s32.totalorder %s172, %s186
    %p188 = scmp.eq.s32.totalorder %s21, 0
    %p189 = por %p187, %p188
    %s191 = sadd.s32 %s190, 1
    %p194 = scmp.eq.s32.totalorder %s15, 1
    %p195 = scmp.ne.s32.totalorder %s190, %s192
    %p196 = scmp.eq.s32.totalorder %s15, 0
    %p197 = por %p195, %p196
    %p198 = scmp.ne.s32.totalorder %s190, %s192
    %p199 = scmp.eq.s32.totalorder %s20, 1
    %p200 = por %p198, %p199
    %p201 = scmp.ne.s32.totalorder %s192, %s193
    %p202 = scmp.eq.s32.totalorder %s20, 0
    %p203 = por %p201, %p202
    %p204 = scmp.ne.s32.totalorder %s192, %s193
    %p205 = scmp.eq.s32.totalorder %s21, 1
    %p206 = por %p204, %p205
    %p208 = scmp.ne.s32.totalorder %s193, %s207
    %p209 = scmp.eq.s32.totalorder %s21, 0
    %p210 = por %p208, %p209
    %s212 = sadd.s32 %s211, 1
    %p215 = scmp.eq.s32.totalorder %s15, 1
    %p216 = scmp.ne.s32.totalorder %s211, %s213
    %p217 = scmp.eq.s32.totalorder %s15, 0
    %p218 = por %p216, %p217
    %p219 = scmp.ne.s32.totalorder %s211, %s213
    %p220 = scmp.eq.s32.totalorder %s20, 1
    %p221 = por %p219, %p220
    %p222 = scmp.ne.s32.totalorder %s213, %s214
    %p223 = scmp.eq.s32.totalorder %s20, 0
    %p224 = por %p222, %p223
    %p225 = scmp.ne.s32.totalorder %s213, %s214
    %p226 = scmp.eq.s32.totalorder %s21, 1
    %p227 = por %p225, %p226
    %p229 = scmp.ne.s32.totalorder %s214, %s228
    %p230 = scmp.eq.s32.totalorder %s21, 0
    %p231 = por %p229, %p230
    %s232 = ssub.s32 %s15, %s22
    %p233 = scmp.eq.s32.totalorder %s232, 0
    %s235 = sadd.s32 %s234, 1
    %s236 = scalar_select %p233, %s234, %s235
    %p239 = pneg %p233
    %p240 = scmp.eq.s32.totalorder %s15, 1
    %p241 = por %p239, %p240
    %p242 = scmp.ne.s32.totalorder %s234, %s237
    %p243 = scmp.eq.s32.totalorder %s15, 0
    %p244 = por %p242, %p243
    %p245 = scmp.ne.s32.totalorder %s234, %s237
    %p246 = scmp.eq.s32.totalorder %s20, 1
    %p247 = por %p245, %p246
    %p248 = scmp.ne.s32.totalorder %s237, %s238
    %p249 = scmp.eq.s32.totalorder %s20, 0
    %p250 = por %p248, %p249
    %p251 = scmp.ne.s32.totalorder %s237, %s238
    %p252 = scmp.eq.s32.totalorder %s21, 1
    %p253 = por %p251, %p252
    %p255 = scmp.ne.s32.totalorder %s238, %s254
    %p256 = scmp.eq.s32.totalorder %s21, 0
    %p257 = por %p255, %p256
    %p258 = scmp.le.s32.totalorder 1, %s15
    %p259 = scmp.lt.s32.totalorder %s15, 3
    %p260 = pnand %p258, %p259
    %p261 = pneg %p260
    // Predicated region
    $region9: #{bert_noCLS_forward.1} parent=5 // pred_check
      _
    $region10: #{bert_noCLS_forward.1} parent=5 // pred_check_branch
      %263 = sbr.rel (%p260) target = $region12
    $region11: #{bert_noCLS_forward.1} parent=5 // pred_region
      %s264 = ssub.s32 %s15, 1
      // Predicated region
      $region13: #{bert_noCLS_forward.1} parent=11 // pred_check
        %p265 = pneg %p140
      $region14: #{bert_noCLS_forward.1} parent=11 // pred_check_branch
        %267 = sbr.rel (%p265) target = $region16
      $region15: #{bert_noCLS_forward.1} parent=11 // pred_region
        _
      $region16: #{bert_noCLS_forward.1} parent=11 // pred_fallthru
        _
      // Predicated region
      $region17: #{bert_noCLS_forward.1} parent=11 // pred_check
        %p268 = pneg %p161
      $region18: #{bert_noCLS_forward.1} parent=11 // pred_check_branch
        %270 = sbr.rel (%p268) target = $region20
      $region19: #{bert_noCLS_forward.1} parent=11 // pred_region
        _
      $region20: #{bert_noCLS_forward.1} parent=11 // pred_fallthru
        _
      // Predicated region
      $region21: #{bert_noCLS_forward.1} parent=11 // pred_check
        %p271 = pneg %p182
      $region22: #{bert_noCLS_forward.1} parent=11 // pred_check_branch
        %273 = sbr.rel (%p271) target = $region24
      $region23: #{bert_noCLS_forward.1} parent=11 // pred_region
        _
      $region24: #{bert_noCLS_forward.1} parent=11 // pred_fallthru
        _
      // Predicated region
      $region25: #{bert_noCLS_forward.1} parent=11 // pred_check
        %p274 = pneg %p203
      $region26: #{bert_noCLS_forward.1} parent=11 // pred_check_branch
        %276 = sbr.rel (%p274) target = $region28
      $region27: #{bert_noCLS_forward.1} parent=11 // pred_region
        _
      $region28: #{bert_noCLS_forward.1} parent=11 // pred_fallthru
        _
      // Predicated region
      $region29: #{bert_noCLS_forward.1} parent=11 // pred_check
        %p277 = pneg %p224
      $region30: #{bert_noCLS_forward.1} parent=11 // pred_check_branch
        %279 = sbr.rel (%p277) target = $region32
      $region31: #{bert_noCLS_forward.1} parent=11 // pred_region
        _
      $region32: #{bert_noCLS_forward.1} parent=11 // pred_fallthru
        _
    $region12: #{bert_noCLS_forward.1} parent=5 // pred_fallthru
      _
    %p280 = scmp.lt.s32.totalorder %s15, 2
    // Predicated region
    $region33: #{bert_noCLS_forward.1} parent=5 // pred_check
      %p281 = pneg %p280
    $region34: #{bert_noCLS_forward.1} parent=5 // pred_check_branch
      %283 = sbr.rel (%p281) target = $region36
    $region35: #{bert_noCLS_forward.1} parent=5 // pred_region
      // Predicated region
      $region37: #{bert_noCLS_forward.1} parent=35 // pred_check
        %p284 = pneg %p35
      $region38: #{bert_noCLS_forward.1} parent=35 // pred_check_branch
        %286 = sbr.rel (%p284) target = $region40
      $region39: #{bert_noCLS_forward.1} parent=35 // pred_region
        %s287 = smul.u32 2, %s15
        %p288 = scmp.lt.s32.totalorder %s287, 3
        %s289 = scalar_select %p288, %s287, 3
        %s290 = smul.addr %s289, 4
        %s291 = scalar_lea.vmem %s0, %s290
        %s292 = smul.u32 2, %s15
      $region40: #{bert_noCLS_forward.1} parent=35 // pred_fallthru
        _
      // Predicated region
      $region41: #{bert_noCLS_forward.1} parent=35 // pred_check
        %p293 = pneg %p61
      $region42: #{bert_noCLS_forward.1} parent=35 // pred_check_branch
        %295 = sbr.rel (%p293) target = $region44
      $region43: #{bert_noCLS_forward.1} parent=35 // pred_region
        %s296 = smul.u32 2, %s15
        %p297 = scmp.lt.s32.totalorder %s296, 3
        %s298 = scalar_select %p297, %s296, 3
        %s299 = smul.addr %s298, 8
        %s300 = scalar_lea.vmem %s1, %s299
        %s301 = smul.u32 2, %s15
      $region44: #{bert_noCLS_forward.1} parent=35 // pred_fallthru
        _
      // Predicated region
      $region45: #{bert_noCLS_forward.1} parent=35 // pred_check
        %p302 = pneg %p87
      $region46: #{bert_noCLS_forward.1} parent=35 // pred_check_branch
        %304 = sbr.rel (%p302) target = $region48
      $region47: #{bert_noCLS_forward.1} parent=35 // pred_region
        %p305 = scmp.lt.s32.totalorder %s15, 1
        %s306 = scalar_select %p305, %s15, 1
        %s307 = smul.addr %s306, 2
        %s308 = smul.addr %s307, 8
        %s309 = scalar_lea.vmem %s2, %s308
      $region48: #{bert_noCLS_forward.1} parent=35 // pred_fallthru
        _
      // Predicated region
      $region49: #{bert_noCLS_forward.1} parent=35 // pred_check
        %p310 = pneg %p113
      $region50: #{bert_noCLS_forward.1} parent=35 // pred_check_branch
        %312 = sbr.rel (%p310) target = $region52
      $region51: #{bert_noCLS_forward.1} parent=35 // pred_region
        %p313 = scmp.lt.s32.totalorder %s15, 1
        %s314 = scalar_select %p313, %s15, 1
        %s315 = smul.addr %s314, 4
        %s316 = smul.addr %s315, 8
        %s317 = scalar_lea.vmem %s3, %s316
      $region52: #{bert_noCLS_forward.1} parent=35 // pred_fallthru
        _
    $region36: #{bert_noCLS_forward.1} parent=5 // pred_fallthru
      _
    %p318 = scmp.le.s32.totalorder 1, %s15
    %p319 = scmp.lt.s32.totalorder %s15, 3
    %p320 = pnand %p318, %p319
    %p321 = pneg %p320
    // Predicated region
    $region53: #{bert_noCLS_forward.1} parent=5 // pred_check
      _
    $region54: #{bert_noCLS_forward.1} parent=5 // pred_check_branch
      %323 = sbr.rel (%p320) target = $region56
    $region55: #{bert_noCLS_forward.1} parent=5 // pred_region
      %s324 = ssub.s32 %s15, 1
      %s325 = smul.u32 2, %s20
      %p326 = scmp.lt.s32.totalorder %s325, 3
      %s327 = scalar_select %p326, %s325, 3
      %s328 = smul.addr %s327, 4
      %s329 = scalar_lea.vmem %s0, %s328
      %p330 = pneg %p41
      %p331 = pneg %p38
      %s332 = smul.u32 2, %s20
      %p333 = scmp.lt.s32.totalorder %s332, 3
      %s334 = scalar_select %p333, %s332, 3
      %s335 = smul.addr %s334, 8
      %s336 = scalar_lea.vmem %s1, %s335
      %p337 = pneg %p67
      %p338 = pneg %p64
      %p339 = scmp.lt.s32.totalorder %s20, 1
      %s340 = scalar_select %p339, %s20, 1
      %s341 = smul.addr %s340, 2
      %s342 = smul.addr %s341, 8
      %s343 = scalar_lea.vmem %s2, %s342
      %p344 = pneg %p93
      %p345 = pneg %p90
      %p346 = scmp.lt.s32.totalorder %s20, 1
      %s347 = scalar_select %p346, %s20, 1
      %s348 = smul.addr %s347, 4
      %s349 = smul.addr %s348, 8
      %s350 = scalar_lea.vmem %s3, %s349
      %p351 = pneg %p119
      %p352 = pneg %p116
      %p353 = pneg %p140
      %p354 = pneg %p137
      %p355 = pneg %p161
      %p356 = pneg %p158
      %p357 = pneg %p182
      %p358 = pneg %p179
      %p359 = pneg %p203
      %p360 = pneg %p200
      %p361 = pneg %p224
      %p362 = pneg %p221
      %p363 = pneg %p250
      %p364 = pneg %p247
      %p365 = scmp.lt.s32.totalorder %s20, 1
      %s366 = scalar_select %p365, %s20, 1
      %s367 = smul.addr %s366, 4
      %s368 = smul.addr %s367, 8
      %s369 = scalar_lea.vmem %s9, %s368
      %s370 = smul.u32 2, %s20
      %p371 = scmp.lt.s32.totalorder %s370, 3
      %s372 = scalar_select %p371, %s370, 3
      %s373 = smul.addr %s372, 4
      %s374 = scalar_lea.vmem %s0, %s373
      %s375 = smul.u32 2, %s20
      %s376 = smul.u32 2, %s20
      %p377 = scmp.lt.s32.totalorder %s376, 3
      %s378 = scalar_select %p377, %s376, 3
      %s379 = smul.addr %s378, 8
      %s380 = scalar_lea.vmem %s1, %s379
      %s381 = smul.u32 2, %s20
      %p382 = scmp.lt.s32.totalorder %s20, 1
      %s383 = scalar_select %p382, %s20, 1
      %s384 = smul.addr %s383, 2
      %s385 = smul.addr %s384, 8
      %s386 = scalar_lea.vmem %s2, %s385
      %p387 = scmp.lt.s32.totalorder %s20, 1
      %s388 = scalar_select %p387, %s20, 1
      %s389 = smul.addr %s388, 4
      %s390 = smul.addr %s389, 8
      %s391 = scalar_lea.vmem %s3, %s390
      %p392 = scmp.lt.s32.totalorder %s20, 1
      %s393 = scalar_select %p392, %s20, 1
      %s394 = smul.addr %s393, 4
      %s395 = smul.addr %s394, 8
      %s396 = scalar_lea.vmem %s9, %s395
      %v398 = vld [vmem:[%s374] sm:$0xf]
      %v399 = vld [vmem:[%s374 + $0x4] sm:$0xf]
      %v400 = vld [vmem:[%s4] sm:$0xf]
      %v401 = vld [vmem:[%s4 + $0x4] sm:$0xf]
      %v402 = vld [vmem:[%s4 + $0x8] sm:$0xf]
      %v403 = vld [vmem:[%s4 + $0xc] sm:$0xf]
      %v404 = vld [vmem:[%s5] sm:$0x1]
      %v406 = vlaneseq
      %v407 = vshrl.u32 %v406, 7
      %v408 = vsub.s32 0, %v407
      %v409 = vrot.slane %v404, %v408
      %v413 = vunpack.c.l.b16 %v398
      %v414 = vunpack.c.l.b16 %v399
      %v415 = vpack.c.b16 %v414, %v413
      %v420 = vunpack.c.l.b16 %v400
      %v421 = vunpack.c.l.b16 %v401
      %v422 = vunpack.c.l.b16 %v402
      %v423 = vunpack.c.l.b16 %v403
      %v424 = vpack.c.b16 %v421, %v420
      %v425 = vpack.c.b16 %v423, %v422
      %vm428 = vcmask 261120
      %v430 = vsel %vm428, %v415, 0
      %432 = vmatprep.subr.bf16.mxu0 0
      %433 = vmatpush1.bf16.msra.mxu0 0
      %434 = vmatprep.subr.bf16.mxu0 0
      %435 = vmatpush1.bf16.msra.mxu0 0
      %436 = vmatprep.subr.bf16.mxu0 0
      %437 = vmatpush1.bf16.msra.mxu0 0
      %438 = vmatprep.subr.bf16.mxu0 0
      %439 = vmatpush1.bf16.msra.mxu0 0
      %440 = vmatprep.subr.bf16.mxu0 0
      %441 = vmatpush1.bf16.msra.mxu0 0
      %442 = vmatprep.subr.bf16.mxu0 0
      %443 = vmatpush1.bf16.msra.mxu0 0
      %444 = vmatprep.subr.bf16.mxu0 0
      %445 = vmatpush1.bf16.msra.mxu0 %v425
      %446 = vmatprep.subr.bf16.mxu0 0
      %447 = vmatpush1.bf16.msra.mxu0 %v424
      %448 = vmatprep.subr.bf16.mxu0 0
      %449 = vmatpush2.bf16.msra.mxu0 0
      %450 = vmatprep.subr.bf16.mxu0 0
      %451 = vmatpush2.bf16.msra.mxu0 0
      %452 = vmatprep.subr.bf16.mxu0 0
      %453 = vmatpush2.bf16.msra.mxu0 0
      %454 = vmatprep.subr.bf16.mxu0 0
      %455 = vmatpush2.bf16.msra.mxu0 0
      %456 = vmatprep.subr.bf16.mxu0 0
      %457 = vmatpush2.bf16.msra.mxu0 0
      %458 = vmatprep.subr.bf16.mxu0 0
      %459 = vmatpush2.bf16.msra.mxu0 0
      %460 = vmatprep.subr.bf16.mxu0 0
      %461 = vmatpush2.bf16.msra.mxu0 0
      %462 = vmatprep.subr.bf16.mxu0 0
      %463 = vmatpush2.bf16.msra.mxu0 0
      %464 = vmatprep.mubr.bf16.mxu0 0
      %465 = vmatmul.mubr.bf16.gmra.mxu0 %v430
      %v466 = vpop.f32.mrf.mxu0
      %v467 = vadd.f32 %v409, %v466
      %v468 = vpop.f32.mrf.mxu0
      %v469 = vpop.f32.mrf.mxu0
      %v470 = vadd.f32 %v409, %v469
      %v471 = vpop.f32.mrf.mxu0
      %472 = vdwg.mxu0
      %v473 = vtanh.pop %v467
      %v474 = vtanh.pop %v470
      %v475 = vld [vmem:[%s380] sm:$0xff]
      %v476 = vld [vmem:[%s380 + $0x8] sm:$0xff]
      %478 = vset.pattern.permute.xlu0 0
      %479 = vperm.xlu0 %478, %v475
      %v480 = vpop.permute.xlu0 %479
      %483 = vset.pattern.permute.xlu0 0
      %484 = vperm.xlu0 %483, %v476
      %v485 = vpop.permute.xlu0 %484
      %v487 = vmul.f32 %v473, %v480
      %v488 = vmul.f32 %v474, %v485
      %489 = vst.msk [vmem:[#allocation2] sm:$0xff] %vm428, %v487
      %490 = vst.msk [vmem:[#allocation2 + $0x8] sm:$0xff] %vm428, %v488
      %v491 = vld [vmem:[%s7] sm:$0x1f]
      %v492 = vld [vmem:[%s8] sm:$0x1]
      %v493 = vld [vmem:[%s6] sm:$0xf]
      %v494 = vld [vmem:[%s6 + $0x4] sm:$0xf]
      %v495 = vld [vmem:[%s6 + $0x8] sm:$0xf]
      %v496 = vld [vmem:[%s6 + $0xc] sm:$0xf]
      %v497 = vld [vmem:[#allocation2] sm:$0xff]
      %v498 = vld [vmem:[#allocation2 + $0x8] sm:$0xff]
      %v499 = vld [vmem:[%s386] sm:$0xff]
      %v500 = vld [vmem:[%s386 + $0x8] sm:$0xff]
      %v501 = vlaneseq
      %v502 = vshrl.u32 %v501, 7
      %v503 = vsub.s32 0, %v502
      %v504 = vrot.slane %v499, %v503
      %506 = vbcast.lane.b32.xlu0 %v504, 256
      %v507 = vpop.permute.xlu0 %506
      %v508 = vlaneseq
      %v509 = vshrl.u32 %v508, 7
      %v510 = vsub.s32 1, %v509
      %v511 = vrot.slane %v499, %v510
      %513 = vbcast.lane.b32.xlu0 %v511, 256
      %v514 = vpop.permute.xlu0 %513
      %v515 = vlaneseq
      %v516 = vshrl.u32 %v515, 7
      %v517 = vsub.s32 2, %v516
      %v518 = vrot.slane %v499, %v517
      %520 = vbcast.lane.b32.xlu0 %v518, 256
      %v521 = vpop.permute.xlu0 %520
      %v522 = vlaneseq
      %v523 = vshrl.u32 %v522, 7
      %v524 = vsub.s32 3, %v523
      %v525 = vrot.slane %v499, %v524
      %527 = vbcast.lane.b32.xlu0 %v525, 256
      %v528 = vpop.permute.xlu0 %527
      %v529 = vlaneseq
      %v530 = vshrl.u32 %v529, 7
      %v531 = vsub.s32 4, %v530
      %v532 = vrot.slane %v499, %v531
      %534 = vbcast.lane.b32.xlu0 %v532, 256
      %v535 = vpop.permute.xlu0 %534
      %v536 = vlaneseq
      %v537 = vshrl.u32 %v536, 7
      %v538 = vsub.s32 5, %v537
      %v539 = vrot.slane %v499, %v538
      %541 = vbcast.lane.b32.xlu0 %v539, 256
      %v542 = vpop.permute.xlu0 %541
      %v543 = vlaneseq
      %v544 = vshrl.u32 %v543, 7
      %v545 = vsub.s32 6, %v544
      %v546 = vrot.slane %v499, %v545
      %548 = vbcast.lane.b32.xlu0 %v546, 256
      %v549 = vpop.permute.xlu0 %548
      %v550 = vlaneseq
      %v551 = vshrl.u32 %v550, 7
      %v552 = vsub.s32 7, %v551
      %v553 = vrot.slane %v499, %v552
      %555 = vbcast.lane.b32.xlu0 %v553, 256
      %v556 = vpop.permute.xlu0 %555
      %v557 = vlaneseq
      %v558 = vshrl.u32 %v557, 7
      %v559 = vsub.s32 0, %v558
      %v560 = vrot.slane %v500, %v559
      %562 = vbcast.lane.b32.xlu0 %v560, 256
      %v563 = vpop.permute.xlu0 %562
      %v564 = vlaneseq
      %v565 = vshrl.u32 %v564, 7
      %v566 = vsub.s32 1, %v565
      %v567 = vrot.slane %v500, %v566
      %569 = vbcast.lane.b32.xlu0 %v567, 256
      %v570 = vpop.permute.xlu0 %569
      %v571 = vlaneseq
      %v572 = vshrl.u32 %v571, 7
      %v573 = vsub.s32 2, %v572
      %v574 = vrot.slane %v500, %v573
      %576 = vbcast.lane.b32.xlu0 %v574, 256
      %v577 = vpop.permute.xlu0 %576
      %v578 = vlaneseq
      %v579 = vshrl.u32 %v578, 7
      %v580 = vsub.s32 3, %v579
      %v581 = vrot.slane %v500, %v580
      %583 = vbcast.lane.b32.xlu0 %v581, 256
      %v584 = vpop.permute.xlu0 %583
      %v585 = vlaneseq
      %v586 = vshrl.u32 %v585, 7
      %v587 = vsub.s32 4, %v586
      %v588 = vrot.slane %v500, %v587
      %590 = vbcast.lane.b32.xlu0 %v588, 256
      %v591 = vpop.permute.xlu0 %590
      %v592 = vlaneseq
      %v593 = vshrl.u32 %v592, 7
      %v594 = vsub.s32 5, %v593
      %v595 = vrot.slane %v500, %v594
      %597 = vbcast.lane.b32.xlu0 %v595, 256
      %v598 = vpop.permute.xlu0 %597
      %v599 = vlaneseq
      %v600 = vshrl.u32 %v599, 7
      %v601 = vsub.s32 6, %v600
      %v602 = vrot.slane %v500, %v601
      %604 = vbcast.lane.b32.xlu0 %v602, 256
      %v605 = vpop.permute.xlu0 %604
      %v606 = vlaneseq
      %v607 = vshrl.u32 %v606, 7
      %v608 = vsub.s32 7, %v607
      %v609 = vrot.slane %v500, %v608
      %611 = vbcast.lane.b32.xlu0 %v609, 256
      %v612 = vpop.permute.xlu0 %611
      %vm613 = vcmp.gt.f32.partialorder %v507, 0.0
      %vm614 = vcmp.gt.f32.partialorder %v514, 0.0
      %vm615 = vcmp.gt.f32.partialorder %v521, 0.0
      %vm616 = vcmp.gt.f32.partialorder %v528, 0.0
      %vm617 = vcmp.gt.f32.partialorder %v535, 0.0
      %vm618 = vcmp.gt.f32.partialorder %v542, 0.0
      %vm619 = vcmp.gt.f32.partialorder %v549, 0.0
      %vm620 = vcmp.gt.f32.partialorder %v556, 0.0
      %vm621 = vcmp.gt.f32.partialorder %v563, 0.0
      %vm622 = vcmp.gt.f32.partialorder %v570, 0.0
      %vm623 = vcmp.gt.f32.partialorder %v577, 0.0
      %vm624 = vcmp.gt.f32.partialorder %v584, 0.0
      %vm625 = vcmp.gt.f32.partialorder %v591, 0.0
      %vm626 = vcmp.gt.f32.partialorder %v598, 0.0
      %vm627 = vcmp.gt.f32.partialorder %v605, 0.0
      %vm628 = vcmp.gt.f32.partialorder %v612, 0.0
      %v631 = vcombine.high %v497, %v497
      %v633 = vunpack.c.l.s4 1966171168
      %v634 = vunpack.c.0.s8 %v633
      %v635 = vlaneseq
      %v636 = vshrl.u32 %v635, 7
      %v637 = vsub.s32 %v634, %v636
      %v638 = vrot.slane %v497, %v637
      %v640 = vunpack.c.l.s4 1966171168
      %v641 = vunpack.c.0.s8 %v640
      %v642 = vlaneseq
      %v643 = vshrl.u32 %v642, 7
      %v644 = vsub.s32 %v641, %v643
      %v645 = vrot.slane %v631, %v644
      %v646 = vcombine.high %v638, %v638
      %v647 = vcombine.high %v645, %v645
      %v649 = vunpack.c.l.s4 1966171168
      %v650 = vunpack.c.0.s8 %v649
      %v651 = vlaneseq
      %v652 = vshrl.u32 %v651, 7
      %v653 = vsub.s32 %v650, %v652
      %v654 = vrot.slane %v638, %v653
      %v656 = vunpack.c.l.s4 1966171168
      %v657 = vunpack.c.0.s8 %v656
      %v658 = vlaneseq
      %v659 = vshrl.u32 %v658, 7
      %v660 = vsub.s32 %v657, %v659
      %v661 = vrot.slane %v645, %v660
      %v663 = vunpack.c.l.s4 1966171168
      %v664 = vunpack.c.0.s8 %v663
      %v665 = vlaneseq
      %v666 = vshrl.u32 %v665, 7
      %v667 = vsub.s32 %v664, %v666
      %v668 = vrot.slane %v646, %v667
      %v670 = vunpack.c.l.s4 1966171168
      %v671 = vunpack.c.0.s8 %v670
      %v672 = vlaneseq
      %v673 = vshrl.u32 %v672, 7
      %v674 = vsub.s32 %v671, %v673
      %v675 = vrot.slane %v647, %v674
      %v676 = vcombine.high %v654, %v654
      %v677 = vcombine.high %v661, %v661
      %v678 = vcombine.high %v668, %v668
      %v679 = vcombine.high %v675, %v675
      %v680 = vcombine.high %v498, %v498
      %v682 = vunpack.c.l.s4 1966171168
      %v683 = vunpack.c.0.s8 %v682
      %v684 = vlaneseq
      %v685 = vshrl.u32 %v684, 7
      %v686 = vsub.s32 %v683, %v685
      %v687 = vrot.slane %v498, %v686
      %v689 = vunpack.c.l.s4 1966171168
      %v690 = vunpack.c.0.s8 %v689
      %v691 = vlaneseq
      %v692 = vshrl.u32 %v691, 7
      %v693 = vsub.s32 %v690, %v692
      %v694 = vrot.slane %v680, %v693
      %v695 = vcombine.high %v687, %v687
      %v696 = vcombine.high %v694, %v694
      %v698 = vunpack.c.l.s4 1966171168
      %v699 = vunpack.c.0.s8 %v698
      %v700 = vlaneseq
      %v701 = vshrl.u32 %v700, 7
      %v702 = vsub.s32 %v699, %v701
      %v703 = vrot.slane %v687, %v702
      %v705 = vunpack.c.l.s4 1966171168
      %v706 = vunpack.c.0.s8 %v705
      %v707 = vlaneseq
      %v708 = vshrl.u32 %v707, 7
      %v709 = vsub.s32 %v706, %v708
      %v710 = vrot.slane %v694, %v709
      %v712 = vunpack.c.l.s4 1966171168
      %v713 = vunpack.c.0.s8 %v712
      %v714 = vlaneseq
      %v715 = vshrl.u32 %v714, 7
      %v716 = vsub.s32 %v713, %v715
      %v717 = vrot.slane %v695, %v716
      %v719 = vunpack.c.l.s4 1966171168
      %v720 = vunpack.c.0.s8 %v719
      %v721 = vlaneseq
      %v722 = vshrl.u32 %v721, 7
      %v723 = vsub.s32 %v720, %v722
      %v724 = vrot.slane %v696, %v723
      %v725 = vcombine.high %v703, %v703
      %v726 = vcombine.high %v710, %v710
      %v727 = vcombine.high %v717, %v717
      %v728 = vcombine.high %v724, %v724
      %v729 = vsel %vm613, 1, 0
      %v730 = vsel %vm614, 1, 0
      %v731 = vsel %vm615, 1, 0
      %v732 = vsel %vm616, 1, 0
      %v733 = vsel %vm617, 1, 0
      %v734 = vsel %vm618, 1, 0
      %v735 = vsel %vm619, 1, 0
      %v736 = vsel %vm620, 1, 0
      %v737 = vsel %vm621, 1, 0
      %v738 = vsel %vm622, 1, 0
      %v739 = vsel %vm623, 1, 0
      %v740 = vsel %vm624, 1, 0
      %v741 = vsel %vm625, 1, 0
      %v742 = vsel %vm626, 1, 0
      %v743 = vsel %vm627, 1, 0
      %v744 = vsel %vm628, 1, 0
      %vm745 = vcmp.eq.s32.totalorder %v729, 1
      %vm746 = vcmp.eq.s32.totalorder %v730, 1
      %vm747 = vcmp.eq.s32.totalorder %v731, 1
      %vm748 = vcmp.eq.s32.totalorder %v732, 1
      %vm749 = vcmp.eq.s32.totalorder %v733, 1
      %vm750 = vcmp.eq.s32.totalorder %v734, 1
      %vm751 = vcmp.eq.s32.totalorder %v735, 1
      %vm752 = vcmp.eq.s32.totalorder %v736, 1
      %vm753 = vcmp.eq.s32.totalorder %v737, 1
      %vm754 = vcmp.eq.s32.totalorder %v738, 1
      %vm755 = vcmp.eq.s32.totalorder %v739, 1
      %vm756 = vcmp.eq.s32.totalorder %v740, 1
      %vm757 = vcmp.eq.s32.totalorder %v741, 1
      %vm758 = vcmp.eq.s32.totalorder %v742, 1
      %vm759 = vcmp.eq.s32.totalorder %v743, 1
      %vm760 = vcmp.eq.s32.totalorder %v744, 1
      %v761 = vlaneseq
      %v762 = vshrl.u32 %v761, 7
      %v763 = vsub.s32 0, %v762
      %v764 = vrot.slane %v654, %v763
      %v765 = vlaneseq
      %v766 = vshrl.u32 %v765, 7
      %v767 = vsub.s32 0, %v766
      %v768 = vrot.slane %v668, %v767
      %v769 = vlaneseq
      %v770 = vshrl.u32 %v769, 7
      %v771 = vsub.s32 0, %v770
      %v772 = vrot.slane %v676, %v771
      %v773 = vlaneseq
      %v774 = vshrl.u32 %v773, 7
      %v775 = vsub.s32 0, %v774
      %v776 = vrot.slane %v678, %v775
      %v777 = vlaneseq
      %v778 = vshrl.u32 %v777, 7
      %v779 = vsub.s32 0, %v778
      %v780 = vrot.slane %v661, %v779
      %v781 = vlaneseq
      %v782 = vshrl.u32 %v781, 7
      %v783 = vsub.s32 0, %v782
      %v784 = vrot.slane %v675, %v783
      %v785 = vlaneseq
      %v786 = vshrl.u32 %v785, 7
      %v787 = vsub.s32 0, %v786
      %v788 = vrot.slane %v677, %v787
      %v789 = vlaneseq
      %v790 = vshrl.u32 %v789, 7
      %v791 = vsub.s32 0, %v790
      %v792 = vrot.slane %v679, %v791
      %v793 = vlaneseq
      %v794 = vshrl.u32 %v793, 7
      %v795 = vsub.s32 0, %v794
      %v796 = vrot.slane %v703, %v795
      %v797 = vlaneseq
      %v798 = vshrl.u32 %v797, 7
      %v799 = vsub.s32 0, %v798
      %v800 = vrot.slane %v717, %v799
      %v801 = vlaneseq
      %v802 = vshrl.u32 %v801, 7
      %v803 = vsub.s32 0, %v802
      %v804 = vrot.slane %v725, %v803
      %v805 = vlaneseq
      %v806 = vshrl.u32 %v805, 7
      %v807 = vsub.s32 0, %v806
      %v808 = vrot.slane %v727, %v807
      %v809 = vlaneseq
      %v810 = vshrl.u32 %v809, 7
      %v811 = vsub.s32 0, %v810
      %v812 = vrot.slane %v710, %v811
      %v813 = vlaneseq
      %v814 = vshrl.u32 %v813, 7
      %v815 = vsub.s32 0, %v814
      %v816 = vrot.slane %v724, %v815
      %v817 = vlaneseq
      %v818 = vshrl.u32 %v817, 7
      %v819 = vsub.s32 0, %v818
      %v820 = vrot.slane %v726, %v819
      %v821 = vlaneseq
      %v822 = vshrl.u32 %v821, 7
      %v823 = vsub.s32 0, %v822
      %v824 = vrot.slane %v728, %v823
      %v841 = vsel %vm745, %v764, -1e+30
      %v842 = vsel %vm746, %v768, -1e+30
      %v843 = vsel %vm747, %v772, -1e+30
      %v844 = vsel %vm748, %v776, -1e+30
      %v845 = vsel %vm749, %v780, -1e+30
      %v846 = vsel %vm750, %v784, -1e+30
      %v847 = vsel %vm751, %v788, -1e+30
      %v848 = vsel %vm752, %v792, -1e+30
      %v849 = vsel %vm753, %v796, -1e+30
      %v850 = vsel %vm754, %v800, -1e+30
      %v851 = vsel %vm755, %v804, -1e+30
      %v852 = vsel %vm756, %v808, -1e+30
      %v853 = vsel %vm757, %v812, -1e+30
      %v854 = vsel %vm758, %v816, -1e+30
      %v855 = vsel %vm759, %v820, -1e+30
      %v856 = vsel %vm760, %v824, -1e+30
      %v857 = vsel %vm428, %v841, -inf
      %v858 = vsel %vm428, %v842, -inf
      %v859 = vsel %vm428, %v843, -inf
      %v860 = vsel %vm428, %v844, -inf
      %v861 = vsel %vm428, %v845, -inf
      %v862 = vmax.f32 %v857, %v861
      %v863 = vsel %vm428, %v846, -inf
      %v864 = vmax.f32 %v858, %v863
      %v865 = vsel %vm428, %v847, -inf
      %v866 = vmax.f32 %v859, %v865
      %v867 = vsel %vm428, %v848, -inf
      %v868 = vmax.f32 %v860, %v867
      %v869 = vsel %vm428, %v849, -inf
      %v870 = vmax.f32 %v862, %v869
      %v871 = vsel %vm428, %v850, -inf
      %v872 = vmax.f32 %v864, %v871
      %v873 = vsel %vm428, %v851, -inf
      %v874 = vmax.f32 %v866, %v873
      %v875 = vsel %vm428, %v852, -inf
      %v876 = vmax.f32 %v868, %v875
      %v877 = vsel %vm428, %v853, -inf
      %v878 = vmax.f32 %v870, %v877
      %v879 = vsel %vm428, %v854, -inf
      %v880 = vmax.f32 %v872, %v879
      %v881 = vsel %vm428, %v855, -inf
      %v882 = vmax.f32 %v874, %v881
      %v883 = vsel %vm428, %v856, -inf
      %v884 = vmax.f32 %v876, %v883
      %v885 = vmax.f32 %v878, %v880
      %v886 = vmax.f32 %v882, %v884
      %v887 = vmax.f32 %v885, %v886
      %v888 = vmax.f32 %v887, -1e+30
      %vm889 = vcmp.gt.f32.partialorder %v888, -1e+20
      %v890 = vsel %vm889, %v888, 0.0
      %v891 = vpack.c.bf16 %v890, %v890
      %v896 = vunpack.c.l.b16 %v493
      %v897 = vunpack.c.l.b16 %v494
      %v898 = vunpack.c.l.b16 %v495
      %v899 = vunpack.c.l.b16 %v496
      %v900 = vpack.c.b16 %v897, %v896
      %v901 = vpack.c.b16 %v899, %v898
      %v905 = vsel %vm428, %v891, 0
      %907 = vmatprep.subr.bf16.mxu0 0
      %908 = vmatpush1.bf16.msra.mxu0 0
      %909 = vmatprep.subr.bf16.mxu0 0
      %910 = vmatpush1.bf16.msra.mxu0 0
      %911 = vmatprep.subr.bf16.mxu0 0
      %912 = vmatpush1.bf16.msra.mxu0 0
      %913 = vmatprep.subr.bf16.mxu0 0
      %914 = vmatpush1.bf16.msra.mxu0 0
      %915 = vmatprep.subr.bf16.mxu0 0
      %916 = vmatpush1.bf16.msra.mxu0 0
      %917 = vmatprep.subr.bf16.mxu0 0
      %918 = vmatpush1.bf16.msra.mxu0 0
      %919 = vmatprep.subr.bf16.mxu0 0
      %920 = vmatpush1.bf16.msra.mxu0 %v901
      %921 = vmatprep.subr.bf16.mxu0 0
      %922 = vmatpush1.bf16.msra.mxu0 %v900
      %923 = vmatprep.subr.bf16.mxu0 0
      %924 = vmatpush2.bf16.msra.mxu0 0
      %925 = vmatprep.subr.bf16.mxu0 0
      %926 = vmatpush2.bf16.msra.mxu0 0
      %927 = vmatprep.subr.bf16.mxu0 0
      %928 = vmatpush2.bf16.msra.mxu0 0
      %929 = vmatprep.subr.bf16.mxu0 0
      %930 = vmatpush2.bf16.msra.mxu0 0
      %931 = vmatprep.subr.bf16.mxu0 0
      %932 = vmatpush2.bf16.msra.mxu0 0
      %933 = vmatprep.subr.bf16.mxu0 0
      %934 = vmatpush2.bf16.msra.mxu0 0
      %935 = vmatprep.subr.bf16.mxu0 0
      %936 = vmatpush2.bf16.msra.mxu0 0
      %937 = vmatprep.subr.bf16.mxu0 0
      %938 = vmatpush2.bf16.msra.mxu0 0
      %939 = vmatprep.mubr.bf16.mxu0 0
      %940 = vmatmul.mubr.bf16.gmra.mxu0 %v905
      %v941 = vpop.f32.mrf.mxu0
      %v942 = vadd.f32 0.0, %v941
      %v943 = vpop.f32.mrf.mxu0
      %v944 = vpop.f32.mrf.mxu0
      %v945 = vpop.f32.mrf.mxu0
      %946 = vdwg.mxu0
      %v948 = vlaneseq
      %v949 = vshrl.u32 %v948, 7
      %v950 = vsub.s32 0, %v949
      %v951 = vrot.slane %v492, %v950
      %v953 = vadd.f32 %v942, %v951
      %v954 = vld [vmem:[%s391] sm:$0xff]
      %v955 = vld [vmem:[%s391 + $0x8] sm:$0xff]
      %v956 = vld [vmem:[%s391 + $0x10] sm:$0xff]
      %v957 = vld [vmem:[%s391 + $0x18] sm:$0xff]
      %959 = vset.pattern.permute.xlu0 0
      %960 = vperm.xlu0 %959, %v954
      %v961 = vpop.permute.xlu0 %960
      %964 = vset.pattern.permute.xlu0 0
      %965 = vperm.xlu0 %964, %v955
      %v966 = vpop.permute.xlu0 %965
      %969 = vset.pattern.permute.xlu0 0
      %970 = vperm.xlu0 %969, %v956
      %v971 = vpop.permute.xlu0 %970
      %974 = vset.pattern.permute.xlu0 0
      %975 = vperm.xlu0 %974, %v957
      %v976 = vpop.permute.xlu0 %975
      %v978 = vlaneseq
      %v979 = vshrl.u32 %v978, 7
      %v980 = vsub.s32 0, %v979
      %v981 = vrot.slane %v491, %v980
      %v982 = vmul.f32 %v961, %v981
      %v983 = vmul.f32 %v966, %v981
      %v984 = vmul.f32 %v971, %v981
      %v985 = vmul.f32 %v976, %v981
      %v986 = vadd.f32 %v953, %v982
      %v987 = vadd.f32 %v953, %v983
      %v988 = vadd.f32 %v953, %v984
      %v989 = vadd.f32 %v953, %v985
      %990 = vset.pattern.permute.xlu0 1
      %991 = vperm.xlu0 %990, %v954
      %v992 = vpop.permute.xlu0 %991
      %994 = vset.pattern.permute.xlu0 1
      %995 = vperm.xlu0 %994, %v955
      %v996 = vpop.permute.xlu0 %995
      %998 = vset.pattern.permute.xlu0 1
      %999 = vperm.xlu0 %998, %v956
      %v1000 = vpop.permute.xlu0 %999
      %1002 = vset.pattern.permute.xlu0 1
      %1003 = vperm.xlu0 %1002, %v957
      %v1004 = vpop.permute.xlu0 %1003
      %v1006 = vlaneseq
      %v1007 = vshrl.u32 %v1006, 7
      %v1008 = vsub.s32 1, %v1007
      %v1009 = vrot.slane %v491, %v1008
      %v1010 = vmul.f32 %v992, %v1009
      %v1011 = vmul.f32 %v996, %v1009
      %v1012 = vmul.f32 %v1000, %v1009
      %v1013 = vmul.f32 %v1004, %v1009
      %v1014 = vadd.f32 %v986, %v1010
      %v1015 = vadd.f32 %v987, %v1011
      %v1016 = vadd.f32 %v988, %v1012
      %v1017 = vadd.f32 %v989, %v1013
      %1018 = vset.pattern.permute.xlu0 2
      %1019 = vperm.xlu0 %1018, %v954
      %v1020 = vpop.permute.xlu0 %1019
      %1022 = vset.pattern.permute.xlu0 2
      %1023 = vperm.xlu0 %1022, %v955
      %v1024 = vpop.permute.xlu0 %1023
      %1026 = vset.pattern.permute.xlu0 2
      %1027 = vperm.xlu0 %1026, %v956
      %v1028 = vpop.permute.xlu0 %1027
      %1030 = vset.pattern.permute.xlu0 2
      %1031 = vperm.xlu0 %1030, %v957
      %v1032 = vpop.permute.xlu0 %1031
      %v1034 = vlaneseq
      %v1035 = vshrl.u32 %v1034, 7
      %v1036 = vsub.s32 2, %v1035
      %v1037 = vrot.slane %v491, %v1036
      %v1038 = vmul.f32 %v1020, %v1037
      %v1039 = vmul.f32 %v1024, %v1037
      %v1040 = vmul.f32 %v1028, %v1037
      %v1041 = vmul.f32 %v1032, %v1037
      %v1042 = vadd.f32 %v1014, %v1038
      %v1043 = vadd.f32 %v1015, %v1039
      %v1044 = vadd.f32 %v1016, %v1040
      %v1045 = vadd.f32 %v1017, %v1041
      %1046 = vset.pattern.permute.xlu0 3
      %1047 = vperm.xlu0 %1046, %v954
      %v1048 = vpop.permute.xlu0 %1047
      %1050 = vset.pattern.permute.xlu0 3
      %1051 = vperm.xlu0 %1050, %v955
      %v1052 = vpop.permute.xlu0 %1051
      %1054 = vset.pattern.permute.xlu0 3
      %1055 = vperm.xlu0 %1054, %v956
      %v1056 = vpop.permute.xlu0 %1055
      %1058 = vset.pattern.permute.xlu0 3
      %1059 = vperm.xlu0 %1058, %v957
      %v1060 = vpop.permute.xlu0 %1059
      %v1062 = vlaneseq
      %v1063 = vshrl.u32 %v1062, 7
      %v1064 = vsub.s32 3, %v1063
      %v1065 = vrot.slane %v491, %v1064
      %v1066 = vmul.f32 %v1048, %v1065
      %v1067 = vmul.f32 %v1052, %v1065
      %v1068 = vmul.f32 %v1056, %v1065
      %v1069 = vmul.f32 %v1060, %v1065
      %v1070 = vadd.f32 %v1042, %v1066
      %v1071 = vadd.f32 %v1043, %v1067
      %v1072 = vadd.f32 %v1044, %v1068
      %v1073 = vadd.f32 %v1045, %v1069
      %1074 = vset.pattern.permute.xlu0 4
      %1075 = vperm.xlu0 %1074, %v954
      %v1076 = vpop.permute.xlu0 %1075
      %1078 = vset.pattern.permute.xlu0 4
      %1079 = vperm.xlu0 %1078, %v955
      %v1080 = vpop.permute.xlu0 %1079
      %1082 = vset.pattern.permute.xlu0 4
      %1083 = vperm.xlu0 %1082, %v956
      %v1084 = vpop.permute.xlu0 %1083
      %1086 = vset.pattern.permute.xlu0 4
      %1087 = vperm.xlu0 %1086, %v957
      %v1088 = vpop.permute.xlu0 %1087
      %v1090 = vlaneseq
      %v1091 = vshrl.u32 %v1090, 7
      %v1092 = vsub.s32 4, %v1091
      %v1093 = vrot.slane %v491, %v1092
      %v1094 = vmul.f32 %v1076, %v1093
      %v1095 = vmul.f32 %v1080, %v1093
      %v1096 = vmul.f32 %v1084, %v1093
      %v1097 = vmul.f32 %v1088, %v1093
      %v1098 = vadd.f32 %v1070, %v1094
      %v1099 = vadd.f32 %v1071, %v1095
      %v1100 = vadd.f32 %v1072, %v1096
      %v1101 = vadd.f32 %v1073, %v1097
      %1102 = vst [vmem:[%s396] sm:$0xff] %v1098
      %1103 = vst [vmem:[%s396 + $0x8] sm:$0xff] %v1099
      %1104 = vst [vmem:[%s396 + $0x10] sm:$0xff] %v1100
      %1105 = vst [vmem:[%s396 + $0x18] sm:$0xff] %v1101
      %p1106 = scmp.lt.s32.totalorder %s20, 1
      %s1107 = scalar_select %p1106, %s20, 1
      %s1108 = smul.addr %s1107, 4
      %s1109 = smul.addr %s1108, 8
      %s1110 = scalar_lea.vmem %s9, %s1109
      // Predicated region
      $region57: #{bert_noCLS_forward.1} parent=55 // pred_check
        %p1111 = pneg %p247
      $region58: #{bert_noCLS_forward.1} parent=55 // pred_check_branch
        %1113 = sbr.rel (%p1111) target = $region60
      $region59: #{bert_noCLS_forward.1} parent=55 // pred_region
        _
      $region60: #{bert_noCLS_forward.1} parent=55 // pred_fallthru
        _
    $region56: #{bert_noCLS_forward.1} parent=5 // pred_fallthru
      _
    %p1114 = scmp.le.s32.totalorder 2, %s15
    // Predicated region
    $region61: #{bert_noCLS_forward.1} parent=5 // pred_check
      %p1115 = pneg %p1114
    $region62: #{bert_noCLS_forward.1} parent=5 // pred_check_branch
      %1117 = sbr.rel (%p1115) target = $region64
    $region63: #{bert_noCLS_forward.1} parent=5 // pred_region
      %s1118 = ssub.s32 %s15, 2
      // Predicated region
      $region65: #{bert_noCLS_forward.1} parent=63 // pred_check
        %p1119 = pneg %p253
      $region66: #{bert_noCLS_forward.1} parent=63 // pred_check_branch
        %1121 = sbr.rel (%p1119) target = $region68
      $region67: #{bert_noCLS_forward.1} parent=63 // pred_region
        %p1122 = scmp.lt.s32.totalorder %s21, 1
        %s1123 = scalar_select %p1122, %s21, 1
        %s1124 = smul.addr %s1123, 4
        %s1125 = smul.addr %s1124, 8
        %s1126 = scalar_lea.vmem %s9, %s1125
      $region68: #{bert_noCLS_forward.1} parent=63 // pred_fallthru
        _
    $region64: #{bert_noCLS_forward.1} parent=5 // pred_fallthru
      _
  $region6: #{bert_noCLS_forward.1} parent=0 // loop_footer
    %s19 = sadd.s32 1, %s15
  $region7: #{bert_noCLS_forward.1} parent=0 // loop_footer_branch
    %14 = sbr.rel target = $region3
  $region8: #{bert_noCLS_forward.1} parent=0 // loop_exit
    _

</llo_original>
